<compile_context>
chip_gen: v5e
topology: v5e:2x2
jax: 0.10.0
libtpu: 0.0.40
codegen_flags: <defaults>
</compile_context>

<pallas_src>
import jax
import jax.numpy as jnp
from jax.experimental import pallas as pl
from jax.experimental.pallas import tpu as pltpu

IN_FEAT = 221                  # raw feature width (before the 2-wide one-hot)
IN_DIM = IN_FEAT + 2           # 223
H1, H2, H3, OUT = 128, 64, 32, 1
NEG_SLOPE = 1.0                # nn.LeakyReLU(True) -> negative_slope = 1.0 (identity)

_SUBLANE = 16                  # tile granularity that is safe for both f32 and bf16


def _round_up(x, m):
    return ((x + m - 1) // m) * m


def _select_tile(B, batch_tile):
    """Big tiles amortize the ~0.35us/step overhead; enough grid depth keeps the
    input DMA pipelined (>= 2 steps per v7x TensorCore, >= 4 steps on v5e/v6e)."""
    tb = min(batch_tile, _round_up(B, _SUBLANE))
    if B >= 4 * 256:
        tb = min(tb, max(256, _round_up(pl.cdiv(B, 4), _SUBLANE)))
    elif B >= 2 * 256:
        tb = min(tb, max(256, _round_up(pl.cdiv(B, 2), _SUBLANE)))
    return max(tb, _SUBLANE)


def _leaky_relu(h):
    # Identity for NEG_SLOPE == 1.0 (trace-time no-op); guarded path otherwise.
    if NEG_SLOPE == 1.0:
        return h
    return jnp.where(h >= 0, h, jnp.float32(NEG_SLOPE) * h)


def _mlp_kernel(x_ref, a_ref,
                w1a_ref, w1d_ref, b1_ref,
                w2_ref, b2_ref,
                w3_ref, b3_ref,
                w4_ref, b4_ref,
                out_ref):
    x = x_ref[...]                               # (TB, 221) operand dtype (bf16/f32)
    a = a_ref[...]                               # (TB, 1)   f32 in {0., 1.}
    op_dt = x.dtype

    # Layer 1: MXU matmul (f32 accumulate) + folded one-hot(action) FMA.
    h = jnp.dot(x, w1a_ref[...], preferred_element_type=jnp.float32)
    h = h + b1_ref[...] + a * w1d_ref[...]       # (TB, 128) f32
    h = _leaky_relu(h)

    h = jnp.dot(h.astype(op_dt), w2_ref[...],
                preferred_element_type=jnp.float32) + b2_ref[...]   # (TB, 64)
    h = _leaky_relu(h)
    h = jnp.dot(h.astype(op_dt), w3_ref[...],
                preferred_element_type=jnp.float32) + b3_ref[...]   # (TB, 32)
    h = _leaky_relu(h)
    v = jnp.dot(h.astype(op_dt), w4_ref[...],
                preferred_element_type=jnp.float32) + b4_ref[...]   # (TB, 1)
    out_ref[...] = v.astype(out_ref.dtype)


def discriminator_forward(input_data, action, params, *,
                          batch_tile=1024, operand_dtype=jnp.bfloat16):
    """input_data: (B, 221) float; action: (B,) or (B,1) int. Returns (B, 1) f32.

    operand_dtype: dtype the input tile and weight matrices are streamed/fed to the
    MXU in (bf16 default; accumulation is always f32).  Callers that already hold
    bf16 activations pay no conversion and get the halved-HBM-read benefit.
    """
    B = input_data.shape[0]
    (w1, b1), (w2, b2), (w3, b3), (w4, b4) = params

    # Split W1 into the raw-feature part and the one-hot(action) part; fold the
    # one-hot contribution into an effective bias + one per-row FMA.
    w1a = w1[:IN_FEAT].astype(operand_dtype)                                 # (221,128)
    b1_eff = (b1 + w1[IN_FEAT:IN_FEAT + 1]).astype(jnp.float32)              # (1,128)
    w1_delta = (w1[IN_FEAT + 1:IN_FEAT + 2]
                - w1[IN_FEAT:IN_FEAT + 1]).astype(jnp.float32)               # (1,128)

    w2 = w2.astype(operand_dtype)
    w3 = w3.astype(operand_dtype)
    w4 = w4.astype(operand_dtype)
    b2 = b2.astype(jnp.float32)
    b3 = b3.astype(jnp.float32)
    b4 = b4.astype(jnp.float32)

    x = input_data.astype(operand_dtype)
    a = jnp.reshape(action, (B, 1)).astype(jnp.float32)

    tb = _select_tile(B, batch_tile)
    grid_m = pl.cdiv(B, tb)                      # partial last block handled by Pallas

    def batch_spec(feat):
        return pl.BlockSpec((tb, feat), lambda i: (i, 0))

    def resident_spec(arr):
        # Same block every grid step -> stays resident in VMEM (no re-DMA).
        return pl.BlockSpec(arr.shape, lambda i: (0, 0))

    out = pl.pallas_call(
        _mlp_kernel,
        out_shape=jax.ShapeDtypeStruct((B, OUT), jnp.float32),
        grid_spec=pltpu.PrefetchScalarGridSpec(
            num_scalar_prefetch=0,
            grid=(grid_m,),
            in_specs=[
                batch_spec(IN_FEAT),              # x       (TB, 221)
                batch_spec(1),                    # action  (TB, 1) f32
                resident_spec(w1a), resident_spec(w1_delta), resident_spec(b1_eff),
                resident_spec(w2), resident_spec(b2),
                resident_spec(w3), resident_spec(b3),
                resident_spec(w4), resident_spec(b4),
            ],
            out_specs=pl.BlockSpec((tb, OUT), lambda i: (i, 0)),
        ),
        compiler_params=pltpu.CompilerParams(
            dimension_semantics=("parallel",)),
    )(x, a, w1a, w1_delta, b1_eff, w2, b2, w3, b3, w4, b4)
    return out


def _orthogonal(key, rows, cols):
    """Deterministic orthogonal init (same spirit as nn.init.orthogonal_)."""
    flat = jax.random.normal(key, (max(rows, cols), min(rows, cols)), dtype=jnp.float32)
    q, r = jnp.linalg.qr(flat)
    q = q * jnp.sign(jnp.diagonal(r))[None, :]
    if rows < cols:
        q = q.T
    return q[:rows, :cols]


def init_params(key):
    """Weights already transposed to [in, out]; biases as [1, out] (zeros)."""
    ks = jax.random.split(key, 4)
    dims = [(IN_DIM, H1), (H1, H2), (H2, H3), (H3, OUT)]
    params = []
    for k, (din, dout) in zip(ks, dims):
        w_pt = _orthogonal(k, dout, din)          # PyTorch layout (out, in)
        w = jnp.asarray(w_pt.T, jnp.float32)      # kernel layout (in, out)
        b = jnp.zeros((1, dout), jnp.float32)
        params.append((w, b))
    return params


def _reference(input_data, action, params):
    obs = jnp.concatenate(
        [input_data, jax.nn.one_hot(action, 2, dtype=input_data.dtype)], axis=1)
    h = obs
    for (w, b) in params[:-1]:
        h = h @ w + b
        h = jnp.where(h >= 0, h, NEG_SLOPE * h)   # identity (slope 1.0), kept for fidelity
    return h @ params[-1][0] + params[-1][1]


if __name__ == "__main__":
    key = jax.random.PRNGKey(0)
    k_param, k_x, k_a, k_x2, k_a2 = jax.random.split(key, 5)

    params = init_params(k_param)

    # Tolerance note: the TPU MXU truncates matmul operands toward bf16 at default
    # precision for BOTH the kernel and the jnp reference, so a loose tolerance is
    # the honest comparison; accumulation is f32 everywhere.
    TOL = 5e-2

    # Demo 1: small batch, single tile, f32 operand streaming.
    B = 8
    x = jax.random.normal(k_x, (B, IN_FEAT), dtype=jnp.float32)
    a = jax.random.randint(k_a, (B,), 0, 2, dtype=jnp.int32)
    v = jax.block_until_ready(
        discriminator_forward(x, a, params, operand_dtype=jnp.float32))
    v_ref = _reference(x, a, params)
    assert v.shape == (B, OUT)
    assert jnp.allclose(v, v_ref, atol=TOL, rtol=TOL), \
        float(jnp.max(jnp.abs(v - v_ref)))

    # Demo 2: ragged batch (partial last block, no wrapper padding), bf16 operands.
    B2 = 300
    x2 = jax.random.normal(k_x2, (B2, IN_FEAT), dtype=jnp.float32)
    a2 = jax.random.randint(k_a2, (B2,), 0, 2, dtype=jnp.int32)
    v2 = jax.block_until_ready(
        discriminator_forward(x2, a2, params, batch_tile=128))
    v2_ref = _reference(x2, a2, params)
    assert v2.shape == (B2, OUT)
    assert jnp.allclose(v2, v2_ref, atol=TOL, rtol=TOL), \
        float(jnp.max(jnp.abs(v2 - v2_ref)))

    print("KERNEL_OK")
</pallas_src>

<mosaic_0001>
module attributes {stable_mosaic.version = 11 : i64} {
  func.func @_mlp_kernel(%arg0: i32, %arg1: memref<16x221xf32, #tpu.memory_space<vmem>>, %arg2: memref<16x1xf32, #tpu.memory_space<vmem>>, %arg3: memref<221x128xf32, #tpu.memory_space<vmem>>, %arg4: memref<1x128xf32, #tpu.memory_space<vmem>>, %arg5: memref<1x128xf32, #tpu.memory_space<vmem>>, %arg6: memref<128x64xf32, #tpu.memory_space<vmem>>, %arg7: memref<1x64xf32, #tpu.memory_space<vmem>>, %arg8: memref<64x32xf32, #tpu.memory_space<vmem>>, %arg9: memref<1x32xf32, #tpu.memory_space<vmem>>, %arg10: memref<32x1xf32, #tpu.memory_space<vmem>>, %arg11: memref<1x1xf32, #tpu.memory_space<vmem>>, %arg12: memref<16x1xf32, #tpu.memory_space<vmem>>) attributes {dimension_semantics = [#tpu.dimension_semantics<parallel>], iteration_bounds = array<i64: 1>, scalar_prefetch = 0 : i64, scratch_operands = 0 : i64, tpu.core_type = #tpu.core_type<tc>, window_params = [{transform_indices = @transform_0, window_bounds = array<i64: 16, 221>}, {transform_indices = @transform_1, window_bounds = array<i64: 16, 1>}, {pipeline_mode = #tpu.pipeline_mode<synchronous>, transform_indices = @transform_2, window_bounds = array<i64: 221, 128>}, {pipeline_mode = #tpu.pipeline_mode<synchronous>, transform_indices = @transform_3, window_bounds = array<i64: 1, 128>}, {pipeline_mode = #tpu.pipeline_mode<synchronous>, transform_indices = @transform_4, window_bounds = array<i64: 1, 128>}, {pipeline_mode = #tpu.pipeline_mode<synchronous>, transform_indices = @transform_5, window_bounds = array<i64: 128, 64>}, {pipeline_mode = #tpu.pipeline_mode<synchronous>, transform_indices = @transform_6, window_bounds = array<i64: 1, 64>}, {pipeline_mode = #tpu.pipeline_mode<synchronous>, transform_indices = @transform_7, window_bounds = array<i64: 64, 32>}, {pipeline_mode = #tpu.pipeline_mode<synchronous>, transform_indices = @transform_8, window_bounds = array<i64: 1, 32>}, {pipeline_mode = #tpu.pipeline_mode<synchronous>, transform_indices = @transform_9, window_bounds = array<i64: 32, 1>}, {pipeline_mode = #tpu.pipeline_mode<synchronous>, transform_indices = @transform_10, window_bounds = array<i64: 1, 1>}, {transform_indices = @transform_11, window_bounds = array<i64: 16, 1>}]} {
    %c0 = arith.constant 0 : index
    %c0_0 = arith.constant 0 : index
    %0 = vector.load %arg1[%c0, %c0_0] : memref<16x221xf32, #tpu.memory_space<vmem>>, vector<16x221xf32>
    %c0_1 = arith.constant 0 : index
    %c0_2 = arith.constant 0 : index
    %1 = vector.load %arg2[%c0_1, %c0_2] : memref<16x1xf32, #tpu.memory_space<vmem>>, vector<16x1xf32>
    %c0_3 = arith.constant 0 : index
    %c0_4 = arith.constant 0 : index
    %2 = vector.load %arg3[%c0_3, %c0_4] : memref<221x128xf32, #tpu.memory_space<vmem>>, vector<221x128xf32>
    %cst = arith.constant dense<0.000000e+00> : vector<16x128xf32>
    %3 = tpu.matmul %0, %2, %cst {dimension_numbers = #tpu.dot_dimension_numbers<[1], [0], [0], [1], [0, 0, 1, 1], [], []>} : vector<16x221xf32>, vector<221x128xf32>, vector<16x128xf32> -> vector<16x128xf32>
    %c0_5 = arith.constant 0 : index
    %c0_6 = arith.constant 0 : index
    %4 = vector.load %arg5[%c0_5, %c0_6] : memref<1x128xf32, #tpu.memory_space<vmem>>, vector<1x128xf32>
    %5 = vector.broadcast %4 : vector<1x128xf32> to vector<16x128xf32>
    %6 = arith.addf %3, %5 : vector<16x128xf32>
    %c0_7 = arith.constant 0 : index
    %c0_8 = arith.constant 0 : index
    %7 = vector.load %arg4[%c0_7, %c0_8] : memref<1x128xf32, #tpu.memory_space<vmem>>, vector<1x128xf32>
    %8 = vector.broadcast %1 : vector<16x1xf32> to vector<16x128xf32>
    %9 = vector.broadcast %7 : vector<1x128xf32> to vector<16x128xf32>
    %10 = arith.mulf %8, %9 : vector<16x128xf32>
    %11 = arith.addf %6, %10 : vector<16x128xf32>
    %c0_9 = arith.constant 0 : index
    %c0_10 = arith.constant 0 : index
    %12 = vector.load %arg6[%c0_9, %c0_10] : memref<128x64xf32, #tpu.memory_space<vmem>>, vector<128x64xf32>
    %cst_11 = arith.constant dense<0.000000e+00> : vector<16x64xf32>
    %13 = tpu.matmul %11, %12, %cst_11 {dimension_numbers = #tpu.dot_dimension_numbers<[1], [0], [0], [1], [0, 0, 1, 1], [], []>} : vector<16x128xf32>, vector<128x64xf32>, vector<16x64xf32> -> vector<16x64xf32>
    %c0_12 = arith.constant 0 : index
    %c0_13 = arith.constant 0 : index
    %14 = vector.load %arg7[%c0_12, %c0_13] : memref<1x64xf32, #tpu.memory_space<vmem>>, vector<1x64xf32>
    %15 = vector.broadcast %14 : vector<1x64xf32> to vector<16x64xf32>
    %16 = arith.addf %13, %15 : vector<16x64xf32>
    %c0_14 = arith.constant 0 : index
    %c0_15 = arith.constant 0 : index
    %17 = vector.load %arg8[%c0_14, %c0_15] : memref<64x32xf32, #tpu.memory_space<vmem>>, vector<64x32xf32>
    %cst_16 = arith.constant dense<0.000000e+00> : vector<16x32xf32>
    %18 = tpu.matmul %16, %17, %cst_16 {dimension_numbers = #tpu.dot_dimension_numbers<[1], [0], [0], [1], [0, 0, 1, 1], [], []>} : vector<16x64xf32>, vector<64x32xf32>, vector<16x32xf32> -> vector<16x32xf32>
    %c0_17 = arith.constant 0 : index
    %c0_18 = arith.constant 0 : index
    %19 = vector.load %arg9[%c0_17, %c0_18] : memref<1x32xf32, #tpu.memory_space<vmem>>, vector<1x32xf32>
    %20 = vector.broadcast %19 : vector<1x32xf32> to vector<16x32xf32>
    %21 = arith.addf %18, %20 : vector<16x32xf32>
    %c0_19 = arith.constant 0 : index
    %c0_20 = arith.constant 0 : index
    %22 = vector.load %arg10[%c0_19, %c0_20] : memref<32x1xf32, #tpu.memory_space<vmem>>, vector<32x1xf32>
    %cst_21 = arith.constant dense<0.000000e+00> : vector<16x1xf32>
    %23 = tpu.matmul %21, %22, %cst_21 {dimension_numbers = #tpu.dot_dimension_numbers<[1], [0], [0], [1], [0, 0, 1, 1], [], []>} : vector<16x32xf32>, vector<32x1xf32>, vector<16x1xf32> -> vector<16x1xf32>
    %c0_22 = arith.constant 0 : index
    %c0_23 = arith.constant 0 : index
    %24 = vector.load %arg11[%c0_22, %c0_23] : memref<1x1xf32, #tpu.memory_space<vmem>>, vector<1x1xf32>
    %25 = vector.broadcast %24 : vector<1x1xf32> to vector<16x1xf32>
    %26 = arith.addf %23, %25 : vector<16x1xf32>
    %c0_24 = arith.constant 0 : index
    %c0_25 = arith.constant 0 : index
    %27 = vector.load %arg12[%c0_24, %c0_25] : memref<16x1xf32, #tpu.memory_space<vmem>>, vector<16x1xf32>
    tpu.vector_store %arg12[%c0_24, %c0_25], %26 {strides = array<i32>} : memref<16x1xf32, #tpu.memory_space<vmem>>, vector<16x1xf32>,
    return
  }
  func.func @transform_0(%arg0: i32) -> (i32, i32) {
    %c0_i32 = arith.constant 0 : i32
    %c0_i32_0 = arith.constant 0 : i32
    return %arg0, %c0_i32 : i32, i32
  }
  func.func @transform_1(%arg0: i32) -> (i32, i32) {
    %c0_i32 = arith.constant 0 : i32
    %c0_i32_0 = arith.constant 0 : i32
    return %arg0, %c0_i32 : i32, i32
  }
  func.func @transform_2(%arg0: i32) -> (i32, i32) {
    %c0_i32 = arith.constant 0 : i32
    %c0_i32_0 = arith.constant 0 : i32
    %c0_i32_1 = arith.constant 0 : i32
    return %c0_i32, %c0_i32_0 : i32, i32
  }
  func.func @transform_3(%arg0: i32) -> (i32, i32) {
    %c0_i32 = arith.constant 0 : i32
    %c0_i32_0 = arith.constant 0 : i32
    %c0_i32_1 = arith.constant 0 : i32
    return %c0_i32, %c0_i32_0 : i32, i32
  }
  func.func @transform_4(%arg0: i32) -> (i32, i32) {
    %c0_i32 = arith.constant 0 : i32
    %c0_i32_0 = arith.constant 0 : i32
    %c0_i32_1 = arith.constant 0 : i32
    return %c0_i32, %c0_i32_0 : i32, i32
  }
  func.func @transform_5(%arg0: i32) -> (i32, i32) {
    %c0_i32 = arith.constant 0 : i32
    %c0_i32_0 = arith.constant 0 : i32
    %c0_i32_1 = arith.constant 0 : i32
    return %c0_i32, %c0_i32_0 : i32, i32
  }
  func.func @transform_6(%arg0: i32) -> (i32, i32) {
    %c0_i32 = arith.constant 0 : i32
    %c0_i32_0 = arith.constant 0 : i32
    %c0_i32_1 = arith.constant 0 : i32
    return %c0_i32, %c0_i32_0 : i32, i32
  }
  func.func @transform_7(%arg0: i32) -> (i32, i32) {
    %c0_i32 = arith.constant 0 : i32
    %c0_i32_0 = arith.constant 0 : i32
    %c0_i32_1 = arith.constant 0 : i32
    return %c0_i32, %c0_i32_0 : i32, i32
  }
  func.func @transform_8(%arg0: i32) -> (i32, i32) {
    %c0_i32 = arith.constant 0 : i32
    %c0_i32_0 = arith.constant 0 : i32
    %c0_i32_1 = arith.constant 0 : i32
    return %c0_i32, %c0_i32_0 : i32, i32
  }
  func.func @transform_9(%arg0: i32) -> (i32, i32) {
    %c0_i32 = arith.constant 0 : i32
    %c0_i32_0 = arith.constant 0 : i32
    %c0_i32_1 = arith.constant 0 : i32
    return %c0_i32, %c0_i32_0 : i32, i32
  }
  func.func @transform_10(%arg0: i32) -> (i32, i32) {
    %c0_i32 = arith.constant 0 : i32
    %c0_i32_0 = arith.constant 0 : i32
    %c0_i32_1 = arith.constant 0 : i32
    return %c0_i32, %c0_i32_0 : i32, i32
  }
  func.func @transform_11(%arg0: i32) -> (i32, i32) {
    %c0_i32 = arith.constant 0 : i32
    %c0_i32_0 = arith.constant 0 : i32
    return %arg0, %c0_i32 : i32, i32
  }
}

</mosaic_0001>

<llo_original>
// kernel: tpu_custom_call.1
$region0: #{tpu_custom_call.1}
  #allocation0 [shape = 'u32[]', space=smem, size = 0x4, offset = 0x4, fixed_abs, tag = 'smem constant byte address 0x4 - core index']
  #allocation1 [shape = 'u32[72,128]{1,0:T(1,128)}', space=vmem, size = 0x9000, scoped, tag = 'internal scratch']
  #allocation2 [shape = 'f32[1,1]{1,0:T(1,128)S(1)}', space=vmem, size = 0x200, scoped, tag = 'scoped memory for tpu_custom_call.1']
  %s0 = inlined_call_operand.vmem [shape: f32[8,221], index: 0, kind: input, shape index: {}]
  %s1 = inlined_call_operand.vmem [shape: f32[8,1], index: 1, kind: input, shape index: {}]
  %s2 = inlined_call_operand.vmem [shape: f32[221,128], index: 2, kind: input, shape index: {}]
  %s3 = inlined_call_operand.vmem [shape: f32[1,128], index: 3, kind: input, shape index: {}]
  %s4 = inlined_call_operand.vmem [shape: f32[1,128], index: 4, kind: input, shape index: {}]
  %s5 = inlined_call_operand.vmem [shape: f32[128,64], index: 5, kind: input, shape index: {}]
  %s6 = inlined_call_operand.hbm [shape: f32[1,64], index: 6, kind: input, shape index: {}]
  %s7 = inlined_call_operand.vmem [shape: f32[64,32], index: 7, kind: input, shape index: {}]
  %s8 = inlined_call_operand.hbm [shape: f32[1,32], index: 8, kind: input, shape index: {}]
  %s9 = inlined_call_operand.vmem [shape: f32[32,1], index: 9, kind: input, shape index: {}]
  %s10 = inlined_call_operand.<no memory space> [shape: f32[1,1], index: 10, kind: input, shape index: {}]
  %s11 = inlined_call_operand.vmem [shape: f32[8,1], index: 11, kind: output, shape index: {}]
  %s12 = sld [smem:[#allocation0]]
  $region96: #{tpu_custom_call.1} parent=0
    _
  %s14 = ssub.s32 1, %s12
  %s15 = scalar_select 0, %s14, %s12
  %v16 = vstv %s10
  %17 = vst [vmem:[#allocation2] sm:$0x1] %v16
  $region1: #{tpu_custom_call.1} parent=0
    #allocation3 [shape = 'u8[512]{0}', space=vmem, size = 0x400, scoped, tag = 'input window, operand 6, single buffered']
    #allocation4 [shape = 's32[1]{0}', space=sflag, size = 0x4, scoped, tag = 'scoped memory for tpu_custom_call.1']
    #allocation5 [shape = 'u8[512]{0}', space=vmem, size = 0x400, scoped, tag = 'input window, operand 8, single buffered']
    #allocation6 [shape = 's32[1]{0}', space=sflag, size = 0x4, scoped, tag = 'scoped memory for tpu_custom_call.1']
    #allocation7 [shape = 'u8[8192]{0}', space=vmem, size = 0x2000, scoped, tag = 'output window, operand 0, single buffered']
    %18 = vsyncpa [#allocation4], 0
    %19 = vsyncpa [#allocation6], 0
    // Predicated region
    $region2: #{tpu_custom_call.1} parent=1 // pred_check
      _
    $region3: #{tpu_custom_call.1} parent=1 // pred_check_branch
      %21 = sbr.rel (0) target = $region5
    $region4: #{tpu_custom_call.1} parent=1 // pred_region
      _
    $region5: #{tpu_custom_call.1} parent=1 // pred_fallthru
      _
    // Predicated region
    $region6: #{tpu_custom_call.1} parent=1 // pred_check
      _
    $region7: #{tpu_custom_call.1} parent=1 // pred_check_branch
      %23 = sbr.rel (0) target = $region9
    $region8: #{tpu_custom_call.1} parent=1 // pred_region
      _
    $region9: #{tpu_custom_call.1} parent=1 // pred_fallthru
      _
    // Predicated region
    $region10: #{tpu_custom_call.1} parent=1 // pred_check
      _
    $region11: #{tpu_custom_call.1} parent=1 // pred_check_branch
      %25 = sbr.rel (0) target = $region13
    $region12: #{tpu_custom_call.1} parent=1 // pred_region
      _
    $region13: #{tpu_custom_call.1} parent=1 // pred_fallthru
      _
    // Predicated region
    $region14: #{tpu_custom_call.1} parent=1 // pred_check
      _
    $region15: #{tpu_custom_call.1} parent=1 // pred_check_branch
      %27 = sbr.rel (0) target = $region17
    $region16: #{tpu_custom_call.1} parent=1 // pred_region
      _
    $region17: #{tpu_custom_call.1} parent=1 // pred_fallthru
      _
    // Predicated region
    $region18: #{tpu_custom_call.1} parent=1 // pred_check
      _
    $region19: #{tpu_custom_call.1} parent=1 // pred_check_branch
      %29 = sbr.rel (0) target = $region21
    $region20: #{tpu_custom_call.1} parent=1 // pred_region
      _
    $region21: #{tpu_custom_call.1} parent=1 // pred_fallthru
      _
    // Predicated region
    $region22: #{tpu_custom_call.1} parent=1 // pred_check
      _
    $region23: #{tpu_custom_call.1} parent=1 // pred_check_branch
      %31 = sbr.rel (0) target = $region25
    $region24: #{tpu_custom_call.1} parent=1 // pred_region
      _
    $region25: #{tpu_custom_call.1} parent=1 // pred_fallthru
      _
    // Predicated region
    $region26: #{tpu_custom_call.1} parent=1 // pred_check
      _
    $region27: #{tpu_custom_call.1} parent=1 // pred_check_branch
      %33 = sbr.rel (0) target = $region29
    $region28: #{tpu_custom_call.1} parent=1 // pred_region
      %35 = vsyncadd [#allocation4], 0
      %s37 = sshll.u32 %s6, 4
      %s38 = int_to_ptr.hbm [resolvable:$true] %s37
      %s39 = sshll.u32 [#allocation3], 4
      %s40 = int_to_ptr.vmem [resolvable:$true] %s39
      %42 = dma.hbm_to_vmem [thread:$0]  %s38, 16, %s40, [#allocation4]
    $region29: #{tpu_custom_call.1} parent=1 // pred_fallthru
      _
    // Predicated region
    $region30: #{tpu_custom_call.1} parent=1 // pred_check
      _
    $region31: #{tpu_custom_call.1} parent=1 // pred_check_branch
      %44 = sbr.rel (0) target = $region33
    $region32: #{tpu_custom_call.1} parent=1 // pred_region
      _
    $region33: #{tpu_custom_call.1} parent=1 // pred_fallthru
      _
    // Predicated region
    $region34: #{tpu_custom_call.1} parent=1 // pred_check
      _
    $region35: #{tpu_custom_call.1} parent=1 // pred_check_branch
      %46 = sbr.rel (0) target = $region37
    $region36: #{tpu_custom_call.1} parent=1 // pred_region
      %48 = vsyncadd [#allocation6], 0
      %s50 = sshll.u32 %s8, 4
      %s51 = int_to_ptr.hbm [resolvable:$true] %s50
      %s52 = sshll.u32 [#allocation5], 4
      %s53 = int_to_ptr.vmem [resolvable:$true] %s52
      %55 = dma.hbm_to_vmem [thread:$0]  %s51, 16, %s53, [#allocation6]
    $region37: #{tpu_custom_call.1} parent=1 // pred_fallthru
      _
    // Predicated region
    $region38: #{tpu_custom_call.1} parent=1 // pred_check
      _
    $region39: #{tpu_custom_call.1} parent=1 // pred_check_branch
      %57 = sbr.rel (0) target = $region41
    $region40: #{tpu_custom_call.1} parent=1 // pred_region
      _
    $region41: #{tpu_custom_call.1} parent=1 // pred_fallthru
      _
    // Predicated region
    $region42: #{tpu_custom_call.1} parent=1 // pred_check
      _
    $region43: #{tpu_custom_call.1} parent=1 // pred_check_branch
      %59 = sbr.rel (0) target = $region45
    $region44: #{tpu_custom_call.1} parent=1 // pred_region
      _
    $region45: #{tpu_custom_call.1} parent=1 // pred_fallthru
      _
    // Predicated region
    $region46: #{tpu_custom_call.1} parent=1 // pred_check
      _
    $region47: #{tpu_custom_call.1} parent=1 // pred_check_branch
      %61 = sbr.rel (0) target = $region49
    $region48: #{tpu_custom_call.1} parent=1 // pred_region
      %63 = dma.done [#allocation4], 16
    $region49: #{tpu_custom_call.1} parent=1 // pred_fallthru
      _
    // Predicated region
    $region50: #{tpu_custom_call.1} parent=1 // pred_check
      _
    $region51: #{tpu_custom_call.1} parent=1 // pred_check_branch
      %65 = sbr.rel (0) target = $region53
    $region52: #{tpu_custom_call.1} parent=1 // pred_region
      %67 = dma.done [#allocation6], 16
    $region53: #{tpu_custom_call.1} parent=1 // pred_fallthru
      _
    %v68 = vld [vmem:[%s0] sm:$0xff]
    %v69 = vld [vmem:[%s0 + $0x8] sm:$0xff]
    %v70 = vld [vmem:[%s0 + $0x10] sm:$0xff]
    %v71 = vld [vmem:[%s0 + $0x18] sm:$0xff]
    %v72 = vld [vmem:[%s1] sm:$0xff]
    %v73 = vld [vmem:[%s1 + $0x8] sm:$0xff]
    %v74 = vld [vmem:[%s2] sm:$0xff]
    %v75 = vld [vmem:[%s2 + $0x8] sm:$0xff]
    %v76 = vld [vmem:[%s2 + $0x10] sm:$0xff]
    %v77 = vld [vmem:[%s2 + $0x18] sm:$0xff]
    %v78 = vld [vmem:[%s2 + $0x20] sm:$0xff]
    %v79 = vld [vmem:[%s2 + $0x28] sm:$0xff]
    %v80 = vld [vmem:[%s2 + $0x30] sm:$0xff]
    %v81 = vld [vmem:[%s2 + $0x38] sm:$0xff]
    %v82 = vld [vmem:[%s2 + $0x40] sm:$0xff]
    %v83 = vld [vmem:[%s2 + $0x48] sm:$0xff]
    %v84 = vld [vmem:[%s2 + $0x50] sm:$0xff]
    %v85 = vld [vmem:[%s2 + $0x58] sm:$0xff]
    %v86 = vld [vmem:[%s2 + $0x60] sm:$0xff]
    %v87 = vld [vmem:[%s2 + $0x68] sm:$0xff]
    %v88 = vld [vmem:[%s2 + $0x70] sm:$0xff]
    %v89 = vld [vmem:[%s2 + $0x78] sm:$0xff]
    %v90 = vld [vmem:[%s2 + $0x80] sm:$0xff]
    %v91 = vld [vmem:[%s2 + $0x88] sm:$0xff]
    %v92 = vld [vmem:[%s2 + $0x90] sm:$0xff]
    %v93 = vld [vmem:[%s2 + $0x98] sm:$0xff]
    %v94 = vld [vmem:[%s2 + $0xa0] sm:$0xff]
    %v95 = vld [vmem:[%s2 + $0xa8] sm:$0xff]
    %v96 = vld [vmem:[%s2 + $0xb0] sm:$0xff]
    %v97 = vld [vmem:[%s2 + $0xb8] sm:$0xff]
    %v98 = vld [vmem:[%s2 + $0xc0] sm:$0xff]
    %v99 = vld [vmem:[%s2 + $0xc8] sm:$0xff]
    %v100 = vld [vmem:[%s2 + $0xd0] sm:$0xff]
    %v101 = vld [vmem:[%s2 + $0xd8] sm:$0x1f]
    %v102 = vld [vmem:[%s4] sm:$0x1]
    %v104 = vperm.slane %v102, 0
    %vm106 = vcmask 760832
    %v108 = vsel %vm106, %v69, 0
    %v111 = vsel %vm106, %v71, 0
    %vm113 = vcmask 1044480
    %v115 = vsel %vm113, %v101, 0
    %117 = vmatpush.msra.mxu0 %v89
    %118 = vmatpush.msra.mxu0 %v88
    %119 = vmatpush.msra.mxu0 %v87
    %120 = vmatpush.msra.mxu0 %v86
    %121 = vmatpush.msra.mxu0 %v85
    %122 = vmatpush.msra.mxu0 %v84
    %123 = vmatpush.msra.mxu0 %v83
    %124 = vmatpush.msra.mxu0 %v82
    %125 = vmatpush.msra.mxu0 %v81
    %126 = vmatpush.msra.mxu0 %v80
    %127 = vmatpush.msra.mxu0 %v79
    %128 = vmatpush.msra.mxu0 %v78
    %129 = vmatpush.msra.mxu0 %v77
    %130 = vmatpush.msra.mxu0 %v76
    %131 = vmatpush.msra.mxu0 %v75
    %132 = vmatpush.msra.mxu0 %v74
    %133 = vmatmul.f32.gmra.mxu0 %v68
    %v134 = vpop.f32.mrf.mxu0
    %v135 = vadd.f32 %v104, %v134
    %136 = vmatmul.f32.gmra.mxu0 %v70
    %v137 = vpop.f32.mrf.mxu0
    %v138 = vadd.f32 %v104, %v137
    %139 = vdwg.mxu0
    %140 = vmatpush.msra.mxu0 0.0
    %141 = vmatpush.msra.mxu0 0.0
    %142 = vmatpush.msra.mxu0 0.0
    %143 = vmatpush.msra.mxu0 0.0
    %144 = vmatpush.msra.mxu0 %v115
    %145 = vmatpush.msra.mxu0 %v100
    %146 = vmatpush.msra.mxu0 %v99
    %147 = vmatpush.msra.mxu0 %v98
    %148 = vmatpush.msra.mxu0 %v97
    %149 = vmatpush.msra.mxu0 %v96
    %150 = vmatpush.msra.mxu0 %v95
    %151 = vmatpush.msra.mxu0 %v94
    %152 = vmatpush.msra.mxu0 %v93
    %153 = vmatpush.msra.mxu0 %v92
    %154 = vmatpush.msra.mxu0 %v91
    %155 = vmatpush.msra.mxu0 %v90
    %156 = vmatmul.f32.gmra.mxu0 %v108
    %v157 = vpop.f32.mrf.mxu0
    %v158 = vadd.f32 %v135, %v157
    %159 = vmatmul.f32.gmra.mxu0 %v111
    %v160 = vpop.f32.mrf.mxu0
    %v161 = vadd.f32 %v138, %v160
    %162 = vdwg.mxu0
    %v163 = vld [vmem:[%s3] sm:$0x1]
    %165 = vset.pattern.permute.xlu0 0
    %166 = vperm.xlu0 %165, %v72
    %v167 = vpop.permute.xlu0 %166
    %170 = vset.pattern.permute.xlu0 0
    %171 = vperm.xlu0 %170, %v73
    %v172 = vpop.permute.xlu0 %171
    %v175 = vperm.slane %v163, 0
    %v177 = vmul.f32 %v167, %v175
    %v178 = vmul.f32 %v172, %v175
    %v179 = vadd.f32 %v158, %v177
    %v180 = vadd.f32 %v161, %v178
    %v181 = vld [vmem:[%s5] sm:$0xff]
    %v182 = vld [vmem:[%s5 + $0x8] sm:$0xff]
    %v183 = vld [vmem:[%s5 + $0x10] sm:$0xff]
    %v184 = vld [vmem:[%s5 + $0x18] sm:$0xff]
    %v185 = vld [vmem:[%s5 + $0x20] sm:$0xff]
    %v186 = vld [vmem:[%s5 + $0x28] sm:$0xff]
    %v187 = vld [vmem:[%s5 + $0x30] sm:$0xff]
    %v188 = vld [vmem:[%s5 + $0x38] sm:$0xff]
    %v189 = vld [vmem:[%s5 + $0x40] sm:$0xff]
    %v190 = vld [vmem:[%s5 + $0x48] sm:$0xff]
    %v191 = vld [vmem:[%s5 + $0x50] sm:$0xff]
    %v192 = vld [vmem:[%s5 + $0x58] sm:$0xff]
    %v193 = vld [vmem:[%s5 + $0x60] sm:$0xff]
    %v194 = vld [vmem:[%s5 + $0x68] sm:$0xff]
    %v195 = vld [vmem:[%s5 + $0x70] sm:$0xff]
    %v196 = vld [vmem:[%s5 + $0x78] sm:$0xff]
    %v197 = vld [vmem:[#allocation3] sm:$0x1]
    %v199 = vperm.slane %v197, 0
    %201 = vmatpush.msra.mxu0 %v196
    %202 = vmatpush.msra.mxu0 %v195
    %203 = vmatpush.msra.mxu0 %v194
    %204 = vmatpush.msra.mxu0 %v193
    %205 = vmatpush.msra.mxu0 %v192
    %206 = vmatpush.msra.mxu0 %v191
    %207 = vmatpush.msra.mxu0 %v190
    %208 = vmatpush.msra.mxu0 %v189
    %209 = vmatpush.msra.mxu0 %v188
    %210 = vmatpush.msra.mxu0 %v187
    %211 = vmatpush.msra.mxu0 %v186
    %212 = vmatpush.msra.mxu0 %v185
    %213 = vmatpush.msra.mxu0 %v184
    %214 = vmatpush.msra.mxu0 %v183
    %215 = vmatpush.msra.mxu0 %v182
    %216 = vmatpush.msra.mxu0 %v181
    %217 = vmatmul.f32.gmra.mxu0 %v179
    %v218 = vpop.f32.mrf.mxu0
    %v219 = vadd.f32 %v199, %v218
    %220 = vmatmul.f32.gmra.mxu0 %v180
    %v221 = vpop.f32.mrf.mxu0
    %v222 = vadd.f32 %v199, %v221
    %223 = vdwg.mxu0
    %v224 = vld [vmem:[%s7] sm:$0xff]
    %v225 = vld [vmem:[%s7 + $0x8] sm:$0xff]
    %v226 = vld [vmem:[%s7 + $0x10] sm:$0xff]
    %v227 = vld [vmem:[%s7 + $0x18] sm:$0xff]
    %v228 = vld [vmem:[%s7 + $0x20] sm:$0xff]
    %v229 = vld [vmem:[%s7 + $0x28] sm:$0xff]
    %v230 = vld [vmem:[%s7 + $0x30] sm:$0xff]
    %v231 = vld [vmem:[%s7 + $0x38] sm:$0xff]
    %v232 = vld [vmem:[#allocation5] sm:$0x1]
    %v234 = vperm.slane %v232, 0
    %vm236 = vcmask 523264
    %v238 = vsel %vm236, %v219, 0
    %v241 = vsel %vm236, %v222, 0
    %243 = vmatpush.msra.mxu0 0.0
    %244 = vmatpush.msra.mxu0 0.0
    %245 = vmatpush.msra.mxu0 0.0
    %246 = vmatpush.msra.mxu0 0.0
    %247 = vmatpush.msra.mxu0 0.0
    %248 = vmatpush.msra.mxu0 0.0
    %249 = vmatpush.msra.mxu0 0.0
    %250 = vmatpush.msra.mxu0 0.0
    %251 = vmatpush.msra.mxu0 %v231
    %252 = vmatpush.msra.mxu0 %v230
    %253 = vmatpush.msra.mxu0 %v229
    %254 = vmatpush.msra.mxu0 %v228
    %255 = vmatpush.msra.mxu0 %v227
    %256 = vmatpush.msra.mxu0 %v226
    %257 = vmatpush.msra.mxu0 %v225
    %258 = vmatpush.msra.mxu0 %v224
    %259 = vmatmul.f32.gmra.mxu0 %v238
    %v260 = vpop.f32.mrf.mxu0
    %v261 = vadd.f32 %v234, %v260
    %262 = vmatmul.f32.gmra.mxu0 %v241
    %v263 = vpop.f32.mrf.mxu0
    %v264 = vadd.f32 %v234, %v263
    %265 = vdwg.mxu0
    %v266 = vld [vmem:[%s9] sm:$0xff]
    %v267 = vld [vmem:[%s9 + $0x8] sm:$0xff]
    %v268 = vld [vmem:[%s9 + $0x10] sm:$0xff]
    %v269 = vld [vmem:[%s9 + $0x18] sm:$0xff]
    %v270 = vld [vmem:[#allocation2] sm:$0x1]
    %v272 = vperm.slane %v270, 0
    %vm274 = vcmask 261120
    %v276 = vsel %vm274, %v261, 0
    %v279 = vsel %vm274, %v264, 0
    %281 = vmatpush.msra.mxu0 0.0
    %282 = vmatpush.msra.mxu0 0.0
    %283 = vmatpush.msra.mxu0 0.0
    %284 = vmatpush.msra.mxu0 0.0
    %285 = vmatpush.msra.mxu0 0.0
    %286 = vmatpush.msra.mxu0 0.0
    %287 = vmatpush.msra.mxu0 0.0
    %288 = vmatpush.msra.mxu0 0.0
    %289 = vmatpush.msra.mxu0 0.0
    %290 = vmatpush.msra.mxu0 0.0
    %291 = vmatpush.msra.mxu0 0.0
    %292 = vmatpush.msra.mxu0 0.0
    %293 = vmatpush.msra.mxu0 %v269
    %294 = vmatpush.msra.mxu0 %v268
    %295 = vmatpush.msra.mxu0 %v267
    %296 = vmatpush.msra.mxu0 %v266
    %297 = vmatmul.f32.gmra.mxu0 %v276
    %v298 = vpop.f32.mrf.mxu0
    %v299 = vadd.f32 %v272, %v298
    %300 = vmatmul.f32.gmra.mxu0 %v279
    %v301 = vpop.f32.mrf.mxu0
    %v302 = vadd.f32 %v272, %v301
    %303 = vdwg.mxu0
    %vm304 = vcmask 7168
    %305 = vst.msk [vmem:[#allocation7] sm:$0xff] %vm304, %v299
    %306 = vst.msk [vmem:[#allocation7 + $0x8] sm:$0xff] %vm304, %v302
    // Predicated region
    $region54: #{tpu_custom_call.1} parent=1 // pred_check
      _
    $region55: #{tpu_custom_call.1} parent=1 // pred_check_branch
      %308 = sbr.rel (0) target = $region57
    $region56: #{tpu_custom_call.1} parent=1 // pred_region
      // Predicated region
      $region58: #{tpu_custom_call.1} parent=56 // pred_check
        _
      $region59: #{tpu_custom_call.1} parent=56 // pred_check_branch
        %310 = sbr.rel (0) target = $region61
      $region60: #{tpu_custom_call.1} parent=56 // pred_region
        // Predicated region
        $region62: #{tpu_custom_call.1} parent=60 // pred_check
          _
        $region63: #{tpu_custom_call.1} parent=60 // pred_check_branch
          %312 = sbr.rel (0) target = $region65
        $region64: #{tpu_custom_call.1} parent=60 // pred_region
          // Predicated region
          $region77: #{tpu_custom_call.1} parent=64 // pred_check
            _
          $region78: #{tpu_custom_call.1} parent=64 // pred_check_branch
            %328 = sbr.rel (0) target = $region80
          $region79: #{tpu_custom_call.1} parent=64 // pred_region
            loop: start=0, step=1, limit=1
            $region81: #{tpu_custom_call.1} parent=79 // loop_pre_header
              _
            $region82: #{tpu_custom_call.1} parent=79 // loop_header
              %s330 = sphi 0, %s334
              %p331 = scmp.ge.s32.totalorder %s330, 1
              %s335 = sphi [#allocation7], [#allocation7]
              %s336 = sphi %s11, %s11
            $region83: #{tpu_custom_call.1} parent=79 // loop_header_branch
              %333 = sbr.rel (%p331) target = $region87
            $region84: #{tpu_custom_call.1} parent=79 // loop_body
              %v337 = vld [vmem:[%s335] sm:$0xff]
              %338 = vst [vmem:[%s336] sm:$0xff] %v337
            $region85: #{tpu_custom_call.1} parent=79 // loop_footer
              %s334 = sadd.s32 1, %s330
            $region86: #{tpu_custom_call.1} parent=79 // loop_footer_branch
              %329 = sbr.rel target = $region82
            $region87: #{tpu_custom_call.1} parent=79 // loop_exit
              _
          $region80: #{tpu_custom_call.1} parent=64 // pred_fallthru
            _
          // Predicated region
          $region88: #{tpu_custom_call.1} parent=64 // pred_check
            _
          $region89: #{tpu_custom_call.1} parent=64 // pred_check_branch
            %340 = sbr.rel target = $region91
          $region90: #{tpu_custom_call.1} parent=64 // pred_region
            _
          $region91: #{tpu_custom_call.1} parent=64 // pred_fallthru
            _
        $region65: #{tpu_custom_call.1} parent=60 // pred_fallthru
          _
        // Predicated region
        $region66: #{tpu_custom_call.1} parent=60 // pred_check
          _
        $region67: #{tpu_custom_call.1} parent=60 // pred_check_branch
          %314 = sbr.rel target = $region69
        $region68: #{tpu_custom_call.1} parent=60 // pred_region
          %s316 = ssub.s32 256, 1
          loop: start=0, step=1, limit=1
          $region70: #{tpu_custom_call.1} parent=68 // loop_pre_header
            _
          $region71: #{tpu_custom_call.1} parent=68 // loop_header
            %s318 = sphi 0, %s322
            %p319 = scmp.ge.s32.totalorder %s318, 1
            %s323 = sphi [#allocation7], [#allocation7]
            %s324 = sphi %s11, %s11
          $region72: #{tpu_custom_call.1} parent=68 // loop_header_branch
            %321 = sbr.rel (%p319) target = $region76
          $region73: #{tpu_custom_call.1} parent=68 // loop_body
            %v325 = vld [vmem:[%s323] sm:%s316]
            %326 = vst [vmem:[%s324] sm:%s316] %v325
          $region74: #{tpu_custom_call.1} parent=68 // loop_footer
            %s322 = sadd.s32 1, %s318
          $region75: #{tpu_custom_call.1} parent=68 // loop_footer_branch
            %317 = sbr.rel target = $region71
          $region76: #{tpu_custom_call.1} parent=68 // loop_exit
            _
        $region69: #{tpu_custom_call.1} parent=60 // pred_fallthru
          _
      $region61: #{tpu_custom_call.1} parent=56 // pred_fallthru
        _
      %341 = vnop
    $region57: #{tpu_custom_call.1} parent=1 // pred_fallthru
      _
    // Predicated region
    $region92: #{tpu_custom_call.1} parent=1 // pred_check
      _
    $region93: #{tpu_custom_call.1} parent=1 // pred_check_branch
      %343 = sbr.rel (0) target = $region95
    $region94: #{tpu_custom_call.1} parent=1 // pred_region
      _
    $region95: #{tpu_custom_call.1} parent=1 // pred_fallthru
      _
    %344 = vsyncpa [#allocation4], 1
    %345 = vsyncpa [#allocation6], 1

</llo_original>
